<compile_context>
chip_gen: v6e
topology: v6e:2x2x1
jax: 0.10.0
libtpu: 0.0.40
codegen_flags: <defaults>
</compile_context>

<pallas_src>
import jax
import jax.numpy as jnp
from jax import lax
from jax.experimental import pallas as pl
from jax.experimental.pallas import tpu as pltpu  # noqa: F401  (TPU backend)

# ----- small, CLIP-consistent config -----
B = 2               # batch
S = 8               # sequence length
HIDDEN = 32         # config.hidden_size
INTER = 4 * HIDDEN  # config.intermediate_size = 128


def clip_mlp_kernel(x_ref, p_ref, out_ref):
    t, hdim = x_ref.shape            # (T, H)
    inter = p_ref.shape[1]           # I (lane-dense, 128)

    x = x_ref[...]                                   # (T, H)

    # Static sub-views of the packed parameter slab (all sublane-aligned).
    w1 = p_ref[0:hdim, :]                            # (H, I)   = fc1.weight.T
    w2t = p_ref[hdim:2 * hdim, :]                    # (H, I)   = fc2.weight  (= W2ᵀ)
    biases = p_ref[2 * hdim:2 * hdim + 2, :]         # (2, I)
    b1 = biases[0:1, :]                              # (1, I)
    b2 = biases[1:2, 0:hdim]                         # (1, H)

    # fc1: (T,H) @ (H,I) -> (T,I), single MXU call, f32 accumulate.
    h = jnp.dot(x, w1, preferred_element_type=jnp.float32) + b1

    # quick_gelu: h * sigmoid(1.702*h); exp and reciprocal both on the EUP slot.
    h = h * pl.reciprocal(1.0 + jnp.exp(-1.702 * h), approx=True)

    # fc2 as an NT matmul against W2ᵀ: (T,I) · (H,I)ᵀ -> (T,H).
    y = lax.dot_general(h, w2t, (((1,), (1,)), ((), ())),
                        preferred_element_type=jnp.float32) + b2

    out_ref[...] = y.astype(out_ref.dtype)


def pack_params(params):
    """Pack torch-layout params into one lane-dense (2H+2, INTER) f32 slab.

    params: fc1_w (I,H), fc1_b (I,), fc2_w (H,I), fc2_b (H,)   (torch: (out,in))
    Slab layout: rows [0:H)=W1=(fc1_w)ᵀ, [H:2H)=W2ᵀ=fc2_w, row 2H=b1, row 2H+1=b2 (zero-padded).
    """
    fc1_w = params["fc1_w"].astype(jnp.float32)      # (I, H)
    fc1_b = params["fc1_b"].astype(jnp.float32)      # (I,)
    fc2_w = params["fc2_w"].astype(jnp.float32)      # (H, I)
    fc2_b = params["fc2_b"].astype(jnp.float32)      # (H,)
    i, h = fc1_w.shape

    slab = jnp.zeros((2 * h + 2, i), jnp.float32)
    slab = slab.at[0:h, :].set(fc1_w.T)              # W1  (H, I)
    slab = slab.at[h:2 * h, :].set(fc2_w)            # W2ᵀ (H, I)
    slab = slab.at[2 * h, :].set(fc1_b)              # b1  (I,)
    slab = slab.at[2 * h + 1, 0:h].set(fc2_b)        # b2  (H,) zero-padded to I
    return slab


def clip_mlp(x, params):
    """x: (B, S, HIDDEN) f32.  params: torch-layout dict (see pack_params)."""
    b, s, h = x.shape
    t = b * s
    x2 = x.reshape(t, h).astype(jnp.float32)         # lane axis = HIDDEN
    slab = pack_params(params)                       # (2H+2, INTER)

    full2 = lambda shape: pl.BlockSpec(shape, lambda: (0, 0))

    bytes_accessed = (x2.size + slab.size + t * h) * 4
    cost = pl.CostEstimate(
        flops=2 * t * (h * INTER) * 2,               # two (T,H/I) matmuls
        transcendentals=2 * t * INTER,               # exp + reciprocal per element
        bytes_accessed=bytes_accessed,
    )

    out = pl.pallas_call(
        clip_mlp_kernel,
        out_shape=jax.ShapeDtypeStruct((t, h), jnp.float32),
        # grid=(): single invocation, everything (≈40 KB) VMEM-resident.
        # TODO(synk): at real CLIP dims (H>=768, I>=3072) tile tokens with a
        # "parallel" grid axis (2 TCs on v7x) and keep weights resident via a
        # constant index_map; not worth it at T=16.
        in_specs=[
            full2((t, h)),                 # x
            full2(slab.shape),             # packed W1 | W2ᵀ | b1 | b2
        ],
        out_specs=full2((t, h)),
        cost_estimate=cost,
    )(x2, slab)

    return out.reshape(b, s, h)


# ----- pure-JAX reference (mirrors the PyTorch forward, torch layouts) -----
def clip_mlp_ref(x, p):
    h = x @ p["fc1_w"].T + p["fc1_b"]
    h = h * jax.nn.sigmoid(1.702 * h)
    return h @ p["fc2_w"].T + p["fc2_b"]


def init_params(key):
    k1, k2, k3, k4 = jax.random.split(key, 4)
    n = lambda k, shape, s=0.02: (s * jax.random.normal(k, shape)).astype(jnp.float32)
    return {
        "fc1_w": n(k1, (INTER, HIDDEN)),   # torch nn.Linear weight: (out, in)
        "fc1_b": n(k2, (INTER,)),
        "fc2_w": n(k3, (HIDDEN, INTER)),
        "fc2_b": n(k4, (HIDDEN,)),
    }


if __name__ == "__main__":
    key = jax.random.PRNGKey(0)
    k_x, k_p = jax.random.split(key)

    x = jax.random.normal(k_x, (B, S, HIDDEN), dtype=jnp.float32)
    params = init_params(k_p)

    out = clip_mlp(x, params)
    out = jax.block_until_ready(out)

    ref = clip_mlp_ref(x, params)
    assert out.shape == (B, S, HIDDEN)
    err = float(jnp.max(jnp.abs(out - ref)))
    # approx=True reciprocal on the EUP is the only deviation from exact f32;
    # its relative error is far below 1e-4 at these magnitudes.
    assert jnp.allclose(out, ref, atol=1e-4, rtol=1e-4), err
    print("KERNEL_OK")
</pallas_src>

<mosaic_0001>
module attributes {stable_mosaic.version = 11 : i64} {
  func.func @clip_mlp_kernel(%arg0: memref<16x32xf32, #tpu.memory_space<vmem>>, %arg1: memref<66x128xf32, #tpu.memory_space<vmem>>, %arg2: memref<16x32xf32, #tpu.memory_space<vmem>>) attributes {dimension_semantics = [], scalar_prefetch = 0 : i64, scratch_operands = 0 : i64, tpu.core_type = #tpu.core_type<tc>} {
    %c0 = arith.constant 0 : index
    %c0_0 = arith.constant 0 : index
    %0 = vector.load %arg0[%c0, %c0_0] : memref<16x32xf32, #tpu.memory_space<vmem>>, vector<16x32xf32>
    %c0_1 = arith.constant 0 : index
    %c0_2 = arith.constant 0 : index
    %1 = vector.load %arg1[%c0_1, %c0_2] : memref<66x128xf32, #tpu.memory_space<vmem>>, vector<32x128xf32>
    %c32 = arith.constant 32 : index
    %c0_3 = arith.constant 0 : index
    %2 = vector.load %arg1[%c32, %c0_3] : memref<66x128xf32, #tpu.memory_space<vmem>>, vector<32x128xf32>
    %c64 = arith.constant 64 : index
    %c0_4 = arith.constant 0 : index
    %3 = vector.load %arg1[%c64, %c0_4] : memref<66x128xf32, #tpu.memory_space<vmem>>, vector<2x128xf32>
    %4 = vector.extract_strided_slice %3 {offsets = [0, 0], sizes = [1, 128], strides = [1, 1]} : vector<2x128xf32> to vector<1x128xf32>
    %5 = vector.extract_strided_slice %3 {offsets = [1, 0], sizes = [1, 32], strides = [1, 1]} : vector<2x128xf32> to vector<1x32xf32>
    %cst = arith.constant dense<0.000000e+00> : vector<16x128xf32>
    %6 = tpu.matmul %0, %1, %cst {dimension_numbers = #tpu.dot_dimension_numbers<[1], [0], [0], [1], [0, 0, 1, 1], [], []>} : vector<16x32xf32>, vector<32x128xf32>, vector<16x128xf32> -> vector<16x128xf32>
    %7 = vector.broadcast %4 : vector<1x128xf32> to vector<16x128xf32>
    %8 = arith.addf %6, %7 : vector<16x128xf32>
    %cst_5 = arith.constant -1.702000e+00 : f32
    %9 = vector.broadcast %cst_5 : f32 to vector<16x128xf32>
    %10 = arith.mulf %9, %8 : vector<16x128xf32>
    %11 = math.exp %10 : vector<16x128xf32>
    %cst_6 = arith.constant 1.000000e+00 : f32
    %12 = vector.broadcast %cst_6 : f32 to vector<16x128xf32>
    %13 = arith.addf %12, %11 : vector<16x128xf32>
    %14 = tpu.reciprocal %13 {approx = true} : vector<16x128xf32> -> vector<16x128xf32>
    %15 = arith.mulf %8, %14 : vector<16x128xf32>
    %cst_7 = arith.constant dense<0.000000e+00> : vector<16x32xf32>
    %16 = tpu.matmul %15, %2, %cst_7 {dimension_numbers = #tpu.dot_dimension_numbers<[1], [1], [0], [0], [0, 0, 1, 0], [], []>} : vector<16x128xf32>, vector<32x128xf32>, vector<16x32xf32> -> vector<16x32xf32>
    %17 = vector.broadcast %5 : vector<1x32xf32> to vector<16x32xf32>
    %18 = arith.addf %16, %17 : vector<16x32xf32>
    %c0_8 = arith.constant 0 : index
    %c0_9 = arith.constant 0 : index
    %19 = vector.load %arg2[%c0_8, %c0_9] : memref<16x32xf32, #tpu.memory_space<vmem>>, vector<16x32xf32>
    tpu.vector_store %arg2[%c0_8, %c0_9], %18 {strides = array<i32>} : memref<16x32xf32, #tpu.memory_space<vmem>>, vector<16x32xf32>,
    return
  }
}

</mosaic_0001>

<llo_original>
// kernel: tpu_custom_call.1
$region0: #{tpu_custom_call.1}
  #allocation0 [shape = 'u32[]', space=smem, size = 0x4, offset = 0x4, fixed_abs, tag = 'smem constant byte address 0x4 - core index']
  #allocation1 [shape = 'u32[144,128]{1,0:T(1,128)}', space=vmem, size = 0x12000, scoped, tag = 'internal scratch']
  %s0 = inlined_call_operand.hbm [shape: f32[16,32], index: 0, kind: input, shape index: {}]
  %s1 = inlined_call_operand.hbm [shape: f32[66,128], index: 1, kind: input, shape index: {}]
  %s2 = inlined_call_operand.hbm [shape: f32[16,32], index: 2, kind: output, shape index: {}]
  %s3 = sld [smem:[#allocation0]]
  $region26: #{tpu_custom_call.1} parent=0
    _
  %s5 = ssub.s32 1, %s3
  %s6 = scalar_select 0, %s5, %s3
  $region1: #{tpu_custom_call.1} parent=0
    #allocation2 [shape = 'u8[8192]{0}', space=vmem, size = 0x2000, scoped, tag = 'input window, operand 0, single buffered']
    #allocation3 [shape = 's32[1]{0}', space=sflag, size = 0x4, scoped, tag = 'scoped memory for tpu_custom_call.1']
    #allocation4 [shape = 's32[1]{0}', space=sflag, size = 0x4, scoped, tag = 'scoped memory for tpu_custom_call.1']
    #allocation5 [shape = 'u8[36864]{0}', space=vmem, size = 0x9000, scoped, tag = 'input window, operand 1, single buffered']
    #allocation6 [shape = 's32[1]{0}', space=sflag, size = 0x4, scoped, tag = 'scoped memory for tpu_custom_call.1']
    #allocation7 [shape = 'u8[8192]{0}', space=vmem, size = 0x2000, scoped, tag = 'output window, operand 0, single buffered']
    %7 = vsyncpa [#allocation3], 0
    %8 = vsyncpa [#allocation6], 0
    %9 = vsyncpa [#allocation4], 0
    // Predicated region
    $region2: #{tpu_custom_call.1} parent=1 // pred_check
      _
    $region3: #{tpu_custom_call.1} parent=1 // pred_check_branch
      %11 = sbr.rel (0) target = $region5
    $region4: #{tpu_custom_call.1} parent=1 // pred_region
      %s13 = ssub.s32 256, 256
      %14 = vsyncadd [#allocation3], %s13
      %s15 = sshll.u32 [#allocation2], 4
      %s16 = int_to_ptr.vmem [resolvable:$true] %s15
      %21 = dma.hbm_to_vmem [thread:$0]  %s0, 256, %s16, [#allocation3], 128, 128, 8
    $region5: #{tpu_custom_call.1} parent=1 // pred_fallthru
      _
    // Predicated region
    $region6: #{tpu_custom_call.1} parent=1 // pred_check
      _
    $region7: #{tpu_custom_call.1} parent=1 // pred_check_branch
      %23 = sbr.rel (0) target = $region9
    $region8: #{tpu_custom_call.1} parent=1 // pred_region
      %s25 = ssub.s32 1152, 1152
      %26 = vsyncadd [#allocation6], %s25
      %s27 = sshll.u32 [#allocation5], 4
      %s28 = int_to_ptr.vmem [resolvable:$true] %s27
      %33 = dma.hbm_to_vmem [thread:$0]  %s1, 1152, %s28, [#allocation6], 128, 128, 8
    $region9: #{tpu_custom_call.1} parent=1 // pred_fallthru
      _
    // Predicated region
    $region10: #{tpu_custom_call.1} parent=1 // pred_check
      _
    $region11: #{tpu_custom_call.1} parent=1 // pred_check_branch
      %35 = sbr.rel (0) target = $region13
    $region12: #{tpu_custom_call.1} parent=1 // pred_region
      %36 = dma.done [#allocation3], 256
    $region13: #{tpu_custom_call.1} parent=1 // pred_fallthru
      _
    // Predicated region
    $region14: #{tpu_custom_call.1} parent=1 // pred_check
      _
    $region15: #{tpu_custom_call.1} parent=1 // pred_check_branch
      %38 = sbr.rel (0) target = $region17
    $region16: #{tpu_custom_call.1} parent=1 // pred_region
      %39 = dma.done [#allocation6], 1152
    $region17: #{tpu_custom_call.1} parent=1 // pred_fallthru
      _
    %v40 = vld [vmem:[#allocation2] sm:$0xff]
    %v41 = vld [vmem:[#allocation2 + $0x8] sm:$0xff]
    %v42 = vld [vmem:[#allocation5] sm:$0xff]
    %v43 = vld [vmem:[#allocation5 + $0x8] sm:$0xff]
    %v44 = vld [vmem:[#allocation5 + $0x10] sm:$0xff]
    %v45 = vld [vmem:[#allocation5 + $0x18] sm:$0xff]
    %v46 = vld [vmem:[#allocation5 + $0x20] sm:$0xff]
    %v47 = vld [vmem:[#allocation5 + $0x28] sm:$0xff]
    %v48 = vld [vmem:[#allocation5 + $0x30] sm:$0xff]
    %v49 = vld [vmem:[#allocation5 + $0x38] sm:$0xff]
    %v50 = vld [vmem:[#allocation5 + $0x40] sm:$0x3]
    %v51 = vlaneseq
    %v52 = vshrl.u32 %v51, 7
    %v53 = vsub.s32 0, %v52
    %v54 = vrot.slane %v50, %v53
    %vm55 = vcmask 261120
    %v57 = vsel %vm55, %v40, 0
    %v60 = vsel %vm55, %v41, 0
    %62 = vmatprep.subr.mxu0 0.0
    %63 = vmatpush1.msra.mxu0 0.0
    %64 = vmatprep.subr.mxu0 0.0
    %65 = vmatpush1.msra.mxu0 0.0
    %66 = vmatprep.subr.mxu0 0.0
    %67 = vmatpush1.msra.mxu0 0.0
    %68 = vmatprep.subr.mxu0 0.0
    %69 = vmatpush1.msra.mxu0 0.0
    %70 = vmatprep.subr.mxu0 0.0
    %71 = vmatpush1.msra.mxu0 0.0
    %72 = vmatprep.subr.mxu0 0.0
    %73 = vmatpush1.msra.mxu0 0.0
    %74 = vmatprep.subr.mxu0 0.0
    %75 = vmatpush1.msra.mxu0 0.0
    %76 = vmatprep.subr.mxu0 0.0
    %77 = vmatpush1.msra.mxu0 0.0
    %78 = vmatprep.subr.mxu0 0.0
    %79 = vmatpush1.msra.mxu0 0.0
    %80 = vmatprep.subr.mxu0 0.0
    %81 = vmatpush1.msra.mxu0 0.0
    %82 = vmatprep.subr.mxu0 0.0
    %83 = vmatpush1.msra.mxu0 0.0
    %84 = vmatprep.subr.mxu0 0.0
    %85 = vmatpush1.msra.mxu0 0.0
    %86 = vmatprep.subr.mxu0 0.0
    %87 = vmatpush1.msra.mxu0 %v45
    %88 = vmatprep.subr.mxu0 0.0
    %89 = vmatpush1.msra.mxu0 %v44
    %90 = vmatprep.subr.mxu0 0.0
    %91 = vmatpush1.msra.mxu0 %v43
    %92 = vmatprep.subr.mxu0 0.0
    %93 = vmatpush1.msra.mxu0 %v42
    %94 = vmatprep.subr.mxu0 0.0
    %95 = vmatpush2.msra.mxu0 0.0
    %96 = vmatprep.subr.mxu0 0.0
    %97 = vmatpush2.msra.mxu0 0.0
    %98 = vmatprep.subr.mxu0 0.0
    %99 = vmatpush2.msra.mxu0 0.0
    %100 = vmatprep.subr.mxu0 0.0
    %101 = vmatpush2.msra.mxu0 0.0
    %102 = vmatprep.subr.mxu0 0.0
    %103 = vmatpush2.msra.mxu0 0.0
    %104 = vmatprep.subr.mxu0 0.0
    %105 = vmatpush2.msra.mxu0 0.0
    %106 = vmatprep.subr.mxu0 0.0
    %107 = vmatpush2.msra.mxu0 0.0
    %108 = vmatprep.subr.mxu0 0.0
    %109 = vmatpush2.msra.mxu0 0.0
    %110 = vmatprep.subr.mxu0 0.0
    %111 = vmatpush2.msra.mxu0 0.0
    %112 = vmatprep.subr.mxu0 0.0
    %113 = vmatpush2.msra.mxu0 0.0
    %114 = vmatprep.subr.mxu0 0.0
    %115 = vmatpush2.msra.mxu0 0.0
    %116 = vmatprep.subr.mxu0 0.0
    %117 = vmatpush2.msra.mxu0 0.0
    %118 = vmatprep.subr.mxu0 0.0
    %119 = vmatpush2.msra.mxu0 0.0
    %120 = vmatprep.subr.mxu0 0.0
    %121 = vmatpush2.msra.mxu0 0.0
    %122 = vmatprep.subr.mxu0 0.0
    %123 = vmatpush2.msra.mxu0 0.0
    %124 = vmatprep.subr.mxu0 0.0
    %125 = vmatpush2.msra.mxu0 0.0
    %126 = vmatprep.mubr.f32.mxu0 0.0
    %127 = vmatmul.mubr.f32.gmra.mxu0 %v57
    %v128 = vpop.f32.mrf.mxu0
    %v129 = vadd.f32 %v54, %v128
    %v130 = vpop.f32.mrf.mxu0
    %131 = vmatprep.mubr.f32.mxu0 0.0
    %132 = vmatmul.mubr.f32.gmra.mxu0 %v60
    %v133 = vpop.f32.mrf.mxu0
    %v134 = vadd.f32 %v54, %v133
    %v135 = vpop.f32.mrf.mxu0
    %136 = vdwg.mxu0
    %v137 = vmul.f32 %v129, -1.702
    %v138 = vmul.f32 %v134, -1.702
    %v139 = vmul.f32 %v137, 1.442695
    %v140 = vpow.pop %v139
    %v141 = vmul.f32 %v138, 1.442695
    %v142 = vpow.pop %v141
    %v143 = vadd.f32 %v140, 1.0
    %v144 = vadd.f32 %v142, 1.0
    %v145 = vrcp.pop %v143
    %v146 = vrcp.pop %v144
    %v147 = vmul.f32 %v129, %v145
    %v148 = vmul.f32 %v134, %v146
    %v149 = vlaneseq
    %v150 = vshrl.u32 %v149, 7
    %v151 = vsub.s32 1, %v150
    %v152 = vrot.slane %v50, %v151
    %153 = vmatprep.subr.mxu0 0.0
    %154 = vmatpush1.xpose.msra.mxu0 0.0
    %155 = vmatprep.subr.mxu0 0.0
    %156 = vmatpush1.xpose.msra.mxu0 0.0
    %157 = vmatprep.subr.mxu0 0.0
    %158 = vmatpush1.xpose.msra.mxu0 0.0
    %159 = vmatprep.subr.mxu0 0.0
    %160 = vmatpush1.xpose.msra.mxu0 0.0
    %161 = vmatprep.subr.mxu0 0.0
    %162 = vmatpush1.xpose.msra.mxu0 0.0
    %163 = vmatprep.subr.mxu0 0.0
    %164 = vmatpush1.xpose.msra.mxu0 0.0
    %165 = vmatprep.subr.mxu0 0.0
    %166 = vmatpush1.xpose.msra.mxu0 0.0
    %167 = vmatprep.subr.mxu0 0.0
    %168 = vmatpush1.xpose.msra.mxu0 0.0
    %169 = vmatprep.subr.mxu0 0.0
    %170 = vmatpush1.xpose.msra.mxu0 0.0
    %171 = vmatprep.subr.mxu0 0.0
    %172 = vmatpush1.xpose.msra.mxu0 0.0
    %173 = vmatprep.subr.mxu0 0.0
    %174 = vmatpush1.xpose.msra.mxu0 0.0
    %175 = vmatprep.subr.mxu0 0.0
    %176 = vmatpush1.xpose.msra.mxu0 0.0
    %177 = vmatprep.subr.mxu0 0.0
    %178 = vmatpush1.xpose.msra.mxu0 %v49
    %179 = vmatprep.subr.mxu0 0.0
    %180 = vmatpush1.xpose.msra.mxu0 %v48
    %181 = vmatprep.subr.mxu0 0.0
    %182 = vmatpush1.xpose.msra.mxu0 %v47
    %183 = vmatprep.subr.mxu0 0.0
    %184 = vmatpush1.xpose.msra.mxu0 %v46
    %185 = vmatprep.subr.mxu0 0.0
    %186 = vmatpush2.xpose.msra.mxu0 0.0
    %187 = vmatprep.subr.mxu0 0.0
    %188 = vmatpush2.xpose.msra.mxu0 0.0
    %189 = vmatprep.subr.mxu0 0.0
    %190 = vmatpush2.xpose.msra.mxu0 0.0
    %191 = vmatprep.subr.mxu0 0.0
    %192 = vmatpush2.xpose.msra.mxu0 0.0
    %193 = vmatprep.subr.mxu0 0.0
    %194 = vmatpush2.xpose.msra.mxu0 0.0
    %195 = vmatprep.subr.mxu0 0.0
    %196 = vmatpush2.xpose.msra.mxu0 0.0
    %197 = vmatprep.subr.mxu0 0.0
    %198 = vmatpush2.xpose.msra.mxu0 0.0
    %199 = vmatprep.subr.mxu0 0.0
    %200 = vmatpush2.xpose.msra.mxu0 0.0
    %201 = vmatprep.subr.mxu0 0.0
    %202 = vmatpush2.xpose.msra.mxu0 0.0
    %203 = vmatprep.subr.mxu0 0.0
    %204 = vmatpush2.xpose.msra.mxu0 0.0
    %205 = vmatprep.subr.mxu0 0.0
    %206 = vmatpush2.xpose.msra.mxu0 0.0
    %207 = vmatprep.subr.mxu0 0.0
    %208 = vmatpush2.xpose.msra.mxu0 0.0
    %209 = vmatprep.subr.mxu0 0.0
    %210 = vmatpush2.xpose.msra.mxu0 0.0
    %211 = vmatprep.subr.mxu0 0.0
    %212 = vmatpush2.xpose.msra.mxu0 0.0
    %213 = vmatprep.subr.mxu0 0.0
    %214 = vmatpush2.xpose.msra.mxu0 0.0
    %215 = vmatprep.subr.mxu0 0.0
    %216 = vmatpush2.xpose.msra.mxu0 0.0
    %217 = vmatprep.mubr.f32.mxu0 0.0
    %218 = vmatmul.mubr.f32.gmra.mxu0 %v147
    %v219 = vpop.f32.mrf.mxu0
    %v220 = vadd.f32 %v152, %v219
    %v221 = vpop.f32.mrf.mxu0
    %222 = vmatprep.mubr.f32.mxu0 0.0
    %223 = vmatmul.mubr.f32.gmra.mxu0 %v148
    %v224 = vpop.f32.mrf.mxu0
    %v225 = vadd.f32 %v152, %v224
    %v226 = vpop.f32.mrf.mxu0
    %227 = vdwg.mxu0
    %228 = vst.msk [vmem:[#allocation7] sm:$0xff] %vm55, %v220
    %229 = vst.msk [vmem:[#allocation7 + $0x8] sm:$0xff] %vm55, %v225
    // Predicated region
    $region18: #{tpu_custom_call.1} parent=1 // pred_check
      _
    $region19: #{tpu_custom_call.1} parent=1 // pred_check_branch
      %231 = sbr.rel (0) target = $region21
    $region20: #{tpu_custom_call.1} parent=1 // pred_region
      %s233 = ssub.s32 256, 256
      %234 = vsyncadd [#allocation4], %s233
      %s235 = sshll.u32 [#allocation7], 4
      %s236 = int_to_ptr.vmem [resolvable:$true] %s235
      %241 = dma.vmem_to_hbm [thread:$0]  %s236, 256, %s2, [#allocation4], 128, 128, 8
    $region21: #{tpu_custom_call.1} parent=1 // pred_fallthru
      _
    // Predicated region
    $region22: #{tpu_custom_call.1} parent=1 // pred_check
      _
    $region23: #{tpu_custom_call.1} parent=1 // pred_check_branch
      %243 = sbr.rel (0) target = $region25
    $region24: #{tpu_custom_call.1} parent=1 // pred_region
      %244 = dma.done [#allocation4], 256
    $region25: #{tpu_custom_call.1} parent=1 // pred_fallthru
      _
    %245 = vsyncpa [#allocation3], 1
    %246 = vsyncpa [#allocation6], 1
    %247 = vsyncpa [#allocation4], 1

</llo_original>
